<compile_context>
chip_gen: v6e
topology: v6e:2x2x1
jax: 0.10.0
libtpu: 0.0.40
codegen_flags: <defaults>
</compile_context>

<pallas_src>
import numpy as np
import jax
import jax.numpy as jnp
from jax.experimental import pallas as pl
from jax.experimental.pallas import tpu as pltpu


# ----------------------------- host-side parameter setup ---------------------
def _normalized_taps(kernel_1d):
    k = np.asarray(kernel_1d, dtype=np.float32)
    k = k / k.sum()
    return k


def _band_matrix(taps, n_out, n_in, p0):
    """A (n_out, n_in) with A[o, i] = taps[i - o + p0] inside the band, else 0.

    out[o] = sum_i A[o, i] * x[i] = sum_t taps[t] * xpad[o + t]   (xpad = x with
    p0 leading zeros), i.e. one 1-D pass of the padded valid convolution.
    """
    kt = len(taps)
    a = np.zeros((n_out, n_in), dtype=np.float32)
    for o in range(n_out):
        for t in range(kt):
            i = o + t - p0
            if 0 <= i < n_in:
                a[o, i] = taps[t]
    return a


# ----------------------------- VMEM budgeting --------------------------------
def _round_up(v, m):
    return ((v + m - 1) // m) * m


def _vmem_bytes_per_slab(H, W, hout, wout, itemsize):
    """Per-(b*c)-slab VMEM bytes, computed on (8/16, 128)-tiled sizes."""
    sub_io = 16 if itemsize == 2 else 8
    in_blk = _round_up(H, sub_io) * _round_up(W, 128) * itemsize
    out_blk = _round_up(hout, sub_io) * _round_up(wout, 128) * itemsize
    # f32 value temporaries materialized per slab: x cast to f32, the per-slab
    # broadcasts of both band matrices, the pass-1 intermediate, the f32 output.
    tmps = (_round_up(H, 8) * _round_up(W, 128)            # x.astype(f32)
            + _round_up(W, 8) * _round_up(wout, 128)       # Mw broadcast
            + _round_up(hout, 8) * _round_up(H, 128)       # Mh broadcast
            + _round_up(H, 8) * _round_up(wout, 128)       # tmp (pass 1)
            + _round_up(hout, 8) * _round_up(wout, 128)    # out (pass 2, f32)
            ) * 4
    # 2x for double-buffered in/out blocks, +25% slack for MXU staging copies.
    return int((2 * in_blk + 2 * out_blk + tmps) * 1.25)


def _vmem_budget_and_limit():
    """(tile budget, vmem_limit_bytes) per TPU generation."""
    cap = None
    try:
        cap = getattr(pltpu.get_tpu_info(), "vmem_capacity_bytes", None)
    except Exception:
        cap = None
    if cap is not None and cap >= (96 << 20):
        # v5e / v6e: 128 MiB physical VMEM -> large tiles amortize per-step cost.
        return 64 << 20, 100 << 20
    # v7x (64 MiB physical) or unknown: stay conservative.
    return 20 << 20, 44 << 20


def _choose_tbc(bc, per_slab_bytes, budget_bytes):
    """Largest divisor of bc that fits the budget, preferring >= 4 grid steps."""
    cap = max(1, budget_bytes // max(1, per_slab_bytes))
    divs = [d for d in range(1, bc + 1) if bc % d == 0 and d <= cap]
    if not divs:
        return 1
    for min_steps in (4, 2, 1):
        ok = [d for d in divs if bc // d >= min_steps]
        if ok:
            return max(ok)
    return max(divs)


# ------------------------------- Pallas kernel --------------------------------
def _blur_kernel(x_ref, mw_ref, mh_ref, o_ref):
    # x_ref:  (TBC, H, W)      input slab
    # mw_ref: (W, wout)        horizontal band matrix (pads + flipped taps)
    # mh_ref: (hout, H)        vertical band matrix (pads + flipped taps * scale)
    # o_ref:  (TBC, hout, wout)
    x = x_ref[...].astype(jnp.float32)
    tbc = x.shape[0]
    mw = jnp.broadcast_to(mw_ref[...], (tbc,) + tuple(mw_ref.shape))   # (TBC,W,wout)
    mh = jnp.broadcast_to(mh_ref[...], (tbc,) + tuple(mh_ref.shape))   # (TBC,hout,H)

    # Horizontal pass: (TBC,H,W) @ (TBC,W,wout) -> (TBC,H,wout)   [MXU, batched]
    tmp = jax.lax.dot_general(
        x, mw, (((2,), (1,)), ((0,), (0,))),
        preferred_element_type=jnp.float32)
    # Vertical pass:   (TBC,hout,H) @ (TBC,H,wout) -> (TBC,hout,wout)
    out = jax.lax.dot_general(
        mh, tmp, (((2,), (1,)), ((0,), (0,))),
        preferred_element_type=jnp.float32)

    o_ref[...] = out.astype(o_ref.dtype)


def blur(x, kernel_1d, pad, upsample_factor=1, upfirdn_kernel_exp=2):
    """upfirdn2d(x, outer(k,k)/sum [* factor**exp], up=1, down=1, pad=pad), NCHW."""
    B, C, H, W = x.shape
    p0, p1 = pad
    assert p0 >= 0 and p1 >= 0, "negative pads (upfirdn2d crop) not supported"

    k1 = _normalized_taps(kernel_1d)
    kflip = k1[::-1]                                   # flip -> true convolution
    kt = len(k1)
    scale = (float(upsample_factor) ** upfirdn_kernel_exp
             if upsample_factor > 1 else 1.0)

    hout = H + p0 + p1 - kt + 1
    wout = W + p0 + p1 - kt + 1
    assert hout > 0 and wout > 0, (hout, wout)

    # tmp[b,r,j] = sum_c x[b,r,c] * Mw[c,j] ; out[b,i,j] = sum_r Mh[i,r]*tmp[b,r,j]
    mw = jnp.asarray(np.ascontiguousarray(_band_matrix(kflip, wout, W, p0).T))
    mh = jnp.asarray(_band_matrix(kflip, hout, H, p0) * scale)

    BC = B * C
    xf = x.reshape(BC, H, W)                           # metadata-only reshape

    budget, vmem_limit = _vmem_budget_and_limit()
    per_slab = _vmem_bytes_per_slab(H, W, hout, wout, x.dtype.itemsize)
    tbc = _choose_tbc(BC, per_slab, budget)

    out = pl.pallas_call(
        _blur_kernel,
        out_shape=jax.ShapeDtypeStruct((BC, hout, wout), x.dtype),
        grid=(BC // tbc,),
        in_specs=[
            pl.BlockSpec((tbc, H, W), lambda n: (n, 0, 0)),
            pl.BlockSpec((W, wout), lambda n: (0, 0)),
            pl.BlockSpec((hout, H), lambda n: (0, 0)),
        ],
        out_specs=pl.BlockSpec((tbc, hout, wout), lambda n: (n, 0, 0)),
        compiler_params=pltpu.CompilerParams(
            dimension_semantics=("parallel",),
            vmem_limit_bytes=vmem_limit),
    )(xf, mw, mh)
    return out.reshape(B, C, hout, wout)


# ------------------------------ numpy reference -------------------------------
def _blur_ref_numpy(x, kernel_1d, pad):
    """Direct float64 upfirdn2d (up=down=1) reference."""
    B, C, H, W = x.shape
    k = np.asarray(kernel_1d, np.float64)
    k2 = np.outer(k, k)
    k2 = k2 / k2.sum()
    kh, kw = k2.shape
    p0, p1 = pad
    xp = np.zeros((B, C, H + p0 + p1, W + p0 + p1), np.float64)
    xp[:, :, p0:p0 + H, p0:p0 + W] = x.astype(np.float64)
    hout = H + p0 + p1 - kh + 1
    wout = W + p0 + p1 - kw + 1
    kf = k2[::-1, ::-1]                                # flipped (true conv)
    out = np.zeros((B, C, hout, wout), np.float64)
    for p in range(kh):
        for q in range(kw):
            out += kf[p, q] * xp[:, :, p:p + hout, q:q + wout]
    return out.astype(x.dtype)


if __name__ == "__main__":
    # Blur(kernel=[1, 3, 3, 1], pad=(2, 1)) — the standard StyleGAN2 config.
    kernel_1d = [1, 3, 3, 1]
    pad = (2, 1)

    key = jax.random.PRNGKey(0)
    x = jax.random.normal(key, (2, 4, 16, 16), dtype=jnp.float32)

    out = jax.block_until_ready(blur(x, kernel_1d, pad))

    ref = _blur_ref_numpy(np.asarray(x), kernel_1d, pad)
    assert out.shape == ref.shape == (2, 4, 16, 16), out.shape
    # Tolerance leaves headroom for the MXU's f32 pass decomposition; real
    # indexing/pad/normalization bugs would show up as O(0.1-1) errors.
    np.testing.assert_allclose(np.asarray(out), ref, rtol=2e-3, atol=2e-3)
    print("KERNEL_OK")
</pallas_src>

<mosaic_0001>
module attributes {stable_mosaic.version = 11 : i64} {
  func.func @_blur_kernel(%arg0: i32, %arg1: memref<2x16x16xf32, #tpu.memory_space<vmem>>, %arg2: memref<16x16xf32, #tpu.memory_space<vmem>>, %arg3: memref<16x16xf32, #tpu.memory_space<vmem>>, %arg4: memref<2x16x16xf32, #tpu.memory_space<vmem>>) attributes {dimension_semantics = [#tpu.dimension_semantics<parallel>], iteration_bounds = array<i64: 4>, scalar_prefetch = 0 : i64, scratch_operands = 0 : i64, tpu.core_type = #tpu.core_type<tc>, window_params = [{transform_indices = @transform_0, window_bounds = array<i64: 2, 16, 16>}, {pipeline_mode = #tpu.pipeline_mode<synchronous>, transform_indices = @transform_1, window_bounds = array<i64: 16, 16>}, {pipeline_mode = #tpu.pipeline_mode<synchronous>, transform_indices = @transform_2, window_bounds = array<i64: 16, 16>}, {transform_indices = @transform_3, window_bounds = array<i64: 2, 16, 16>}]} {
    %c0 = arith.constant 0 : index
    %c0_0 = arith.constant 0 : index
    %c0_1 = arith.constant 0 : index
    %0 = vector.load %arg1[%c0, %c0_0, %c0_1] : memref<2x16x16xf32, #tpu.memory_space<vmem>>, vector<2x16x16xf32>
    %c0_2 = arith.constant 0 : index
    %c0_3 = arith.constant 0 : index
    %1 = vector.load %arg2[%c0_2, %c0_3] : memref<16x16xf32, #tpu.memory_space<vmem>>, vector<16x16xf32>
    %2 = vector.shape_cast %1 : vector<16x16xf32> to vector<1x16x16xf32>
    %3 = vector.broadcast %2 : vector<1x16x16xf32> to vector<2x16x16xf32>
    %c0_4 = arith.constant 0 : index
    %c0_5 = arith.constant 0 : index
    %4 = vector.load %arg3[%c0_4, %c0_5] : memref<16x16xf32, #tpu.memory_space<vmem>>, vector<16x16xf32>
    %5 = vector.shape_cast %4 : vector<16x16xf32> to vector<1x16x16xf32>
    %6 = vector.broadcast %5 : vector<1x16x16xf32> to vector<2x16x16xf32>
    %cst = arith.constant dense<0.000000e+00> : vector<2x16x16xf32>
    %7 = tpu.matmul %0, %3, %cst {dimension_numbers = #tpu.dot_dimension_numbers<[2], [1], [1], [2], [0, 0, 0, 1, 1, 2], [0], [0]>} : vector<2x16x16xf32>, vector<2x16x16xf32>, vector<2x16x16xf32> -> vector<2x16x16xf32>
    %cst_6 = arith.constant dense<0.000000e+00> : vector<2x16x16xf32>
    %8 = tpu.matmul %6, %7, %cst_6 {dimension_numbers = #tpu.dot_dimension_numbers<[2], [1], [1], [2], [0, 0, 0, 1, 1, 2], [0], [0]>} : vector<2x16x16xf32>, vector<2x16x16xf32>, vector<2x16x16xf32> -> vector<2x16x16xf32>
    %c0_7 = arith.constant 0 : index
    %c0_8 = arith.constant 0 : index
    %c0_9 = arith.constant 0 : index
    %9 = vector.load %arg4[%c0_7, %c0_8, %c0_9] : memref<2x16x16xf32, #tpu.memory_space<vmem>>, vector<2x16x16xf32>
    tpu.vector_store %arg4[%c0_7, %c0_8, %c0_9], %8 {strides = array<i32>} : memref<2x16x16xf32, #tpu.memory_space<vmem>>, vector<2x16x16xf32>,
    return
  }
  func.func @transform_0(%arg0: i32) -> (i32, i32, i32) {
    %c0_i32 = arith.constant 0 : i32
    %c0_i32_0 = arith.constant 0 : i32
    %c0_i32_1 = arith.constant 0 : i32
    return %arg0, %c0_i32, %c0_i32_0 : i32, i32, i32
  }
  func.func @transform_1(%arg0: i32) -> (i32, i32) {
    %c0_i32 = arith.constant 0 : i32
    %c0_i32_0 = arith.constant 0 : i32
    %c0_i32_1 = arith.constant 0 : i32
    return %c0_i32, %c0_i32_0 : i32, i32
  }
  func.func @transform_2(%arg0: i32) -> (i32, i32) {
    %c0_i32 = arith.constant 0 : i32
    %c0_i32_0 = arith.constant 0 : i32
    %c0_i32_1 = arith.constant 0 : i32
    return %c0_i32, %c0_i32_0 : i32, i32
  }
  func.func @transform_3(%arg0: i32) -> (i32, i32, i32) {
    %c0_i32 = arith.constant 0 : i32
    %c0_i32_0 = arith.constant 0 : i32
    %c0_i32_1 = arith.constant 0 : i32
    return %arg0, %c0_i32, %c0_i32_0 : i32, i32, i32
  }
}

</mosaic_0001>

<llo_original>
// kernel: tpu_custom_call.1
$region0: #{tpu_custom_call.1}
  #allocation0 [shape = 'u32[]', space=smem, size = 0x4, offset = 0x4, fixed_abs, tag = 'smem constant byte address 0x4 - core index']
  #allocation1 [shape = 'u32[144,128]{1,0:T(1,128)}', space=vmem, size = 0x12000, scoped, tag = 'internal scratch']
  %s0 = inlined_call_operand.hbm [shape: f32[8,16,16], index: 0, kind: input, shape index: {}]
  %s1 = inlined_call_operand.hbm [shape: f32[16,16], index: 1, kind: input, shape index: {}]
  %s2 = inlined_call_operand.hbm [shape: f32[16,16], index: 2, kind: input, shape index: {}]
  %s3 = inlined_call_operand.hbm [shape: f32[8,16,16], index: 3, kind: output, shape index: {}]
  %s4 = sld [smem:[#allocation0]]
  $region57: #{tpu_custom_call.1} parent=0
    _
  %s6 = ssub.s32 1, %s4
  %s7 = scalar_select 0, %s6, %s4
  $region1: #{tpu_custom_call.1} parent=0
    #allocation2 [shape = 'u8[32768]{0}', space=vmem, size = 0x8000, scoped, tag = 'input window, operand 0']
    #allocation3 [shape = 's32[2]{0}', space=sflag, size = 0x8, scoped, tag = 'scoped memory for tpu_custom_call.1']
    #allocation4 [shape = 's32[2]{0}', space=sflag, size = 0x8, scoped, tag = 'scoped memory for tpu_custom_call.1']
    #allocation5 [shape = 'u8[8192]{0}', space=vmem, size = 0x2000, scoped, tag = 'input window, operand 1, single buffered']
    #allocation6 [shape = 's32[1]{0}', space=sflag, size = 0x4, scoped, tag = 'scoped memory for tpu_custom_call.1']
    #allocation7 [shape = 'u8[8192]{0}', space=vmem, size = 0x2000, scoped, tag = 'input window, operand 2, single buffered']
    #allocation8 [shape = 'u8[32768]{0}', space=vmem, size = 0x8000, scoped, tag = 'output window, operand 0']
    %8 = vsyncpa [#allocation3], 0
    %s9 = scalar_lea.sflag [#allocation3], 1
    %10 = vsyncpa %s9, 0
    %11 = vsyncpa [#allocation6], 0
    %12 = vsyncpa [#allocation4], 0
    %s13 = scalar_lea.sflag [#allocation4], 1
    %14 = vsyncpa %s13, 0
    loop: start=0, step=1, limit=6
    $region2: #{tpu_custom_call.1} parent=1 // loop_pre_header
      _
    $region3: #{tpu_custom_call.1} parent=1 // loop_header
      %s16 = sphi 0, %s20
      %p17 = scmp.ge.s32.totalorder %s16, 6
      %s26 = sphi 0, %s28
      %s29 = sphi 0, %s26
      %s30 = sphi 0, %s29
      %s46 = sphi 0, %s30
      %s50 = sphi 0, %s50
      %s52 = sphi 0, %s50
      %s53 = sphi 0, %s52
      %s67 = sphi 0, %s53
      %s71 = sphi 0, %s71
      %s73 = sphi 0, %s71
      %s74 = sphi 0, %s73
      %s88 = sphi 0, %s74
      %s94 = sphi 0, %s96
      %s97 = sphi 0, %s94
      %s98 = sphi 0, %s97
      %s114 = sphi 0, %s98
    $region4: #{tpu_custom_call.1} parent=1 // loop_header_branch
      %19 = sbr.rel (%p17) target = $region8
    $region5: #{tpu_custom_call.1} parent=1 // loop_body
      %s21 = ssub.s32 %s16, 1
      %s22 = ssub.s32 %s16, 2
      %s23 = sadd.s32 %s16, 1
      %s24 = ssub.s32 %s16, %s23
      %p25 = scmp.eq.s32.totalorder %s24, 0
      %s27 = sadd.s32 %s26, 1
      %s28 = scalar_select %p25, %s26, %s27
      %p31 = pneg %p25
      %p32 = scmp.eq.s32.totalorder %s16, 3
      %p33 = por %p31, %p32
      %p34 = scmp.ne.s32.totalorder %s26, %s29
      %p35 = scmp.eq.s32.totalorder %s16, 0
      %p36 = por %p34, %p35
      %p37 = scmp.ne.s32.totalorder %s26, %s29
      %p38 = scmp.eq.s32.totalorder %s21, 3
      %p39 = por %p37, %p38
      %p40 = scmp.ne.s32.totalorder %s29, %s30
      %p41 = scmp.eq.s32.totalorder %s21, 0
      %p42 = por %p40, %p41
      %p43 = scmp.ne.s32.totalorder %s29, %s30
      %p44 = scmp.eq.s32.totalorder %s22, 3
      %p45 = por %p43, %p44
      %p47 = scmp.ne.s32.totalorder %s30, %s46
      %p48 = scmp.eq.s32.totalorder %s22, 0
      %p49 = por %p47, %p48
      %s51 = sadd.s32 %s50, 1
      %p54 = scmp.eq.s32.totalorder %s16, 3
      %p55 = scmp.ne.s32.totalorder %s50, %s52
      %p56 = scmp.eq.s32.totalorder %s16, 0
      %p57 = por %p55, %p56
      %p58 = scmp.ne.s32.totalorder %s50, %s52
      %p59 = scmp.eq.s32.totalorder %s21, 3
      %p60 = por %p58, %p59
      %p61 = scmp.ne.s32.totalorder %s52, %s53
      %p62 = scmp.eq.s32.totalorder %s21, 0
      %p63 = por %p61, %p62
      %p64 = scmp.ne.s32.totalorder %s52, %s53
      %p65 = scmp.eq.s32.totalorder %s22, 3
      %p66 = por %p64, %p65
      %p68 = scmp.ne.s32.totalorder %s53, %s67
      %p69 = scmp.eq.s32.totalorder %s22, 0
      %p70 = por %p68, %p69
      %s72 = sadd.s32 %s71, 1
      %p75 = scmp.eq.s32.totalorder %s16, 3
      %p76 = scmp.ne.s32.totalorder %s71, %s73
      %p77 = scmp.eq.s32.totalorder %s16, 0
      %p78 = por %p76, %p77
      %p79 = scmp.ne.s32.totalorder %s71, %s73
      %p80 = scmp.eq.s32.totalorder %s21, 3
      %p81 = por %p79, %p80
      %p82 = scmp.ne.s32.totalorder %s73, %s74
      %p83 = scmp.eq.s32.totalorder %s21, 0
      %p84 = por %p82, %p83
      %p85 = scmp.ne.s32.totalorder %s73, %s74
      %p86 = scmp.eq.s32.totalorder %s22, 3
      %p87 = por %p85, %p86
      %p89 = scmp.ne.s32.totalorder %s74, %s88
      %p90 = scmp.eq.s32.totalorder %s22, 0
      %p91 = por %p89, %p90
      %s92 = ssub.s32 %s16, %s23
      %p93 = scmp.eq.s32.totalorder %s92, 0
      %s95 = sadd.s32 %s94, 1
      %s96 = scalar_select %p93, %s94, %s95
      %p99 = pneg %p93
      %p100 = scmp.eq.s32.totalorder %s16, 3
      %p101 = por %p99, %p100
      %p102 = scmp.ne.s32.totalorder %s94, %s97
      %p103 = scmp.eq.s32.totalorder %s16, 0
      %p104 = por %p102, %p103
      %p105 = scmp.ne.s32.totalorder %s94, %s97
      %p106 = scmp.eq.s32.totalorder %s21, 3
      %p107 = por %p105, %p106
      %p108 = scmp.ne.s32.totalorder %s97, %s98
      %p109 = scmp.eq.s32.totalorder %s21, 0
      %p110 = por %p108, %p109
      %p111 = scmp.ne.s32.totalorder %s97, %s98
      %p112 = scmp.eq.s32.totalorder %s22, 3
      %p113 = por %p111, %p112
      %p115 = scmp.ne.s32.totalorder %s98, %s114
      %p116 = scmp.eq.s32.totalorder %s22, 0
      %p117 = por %p115, %p116
      %p118 = scmp.le.s32.totalorder 1, %s16
      %p119 = scmp.lt.s32.totalorder %s16, 5
      %p120 = pnand %p118, %p119
      %p121 = pneg %p120
      // Predicated region
      $region9: #{tpu_custom_call.1} parent=5 // pred_check
        _
      $region10: #{tpu_custom_call.1} parent=5 // pred_check_branch
        %123 = sbr.rel (%p120) target = $region12
      $region11: #{tpu_custom_call.1} parent=5 // pred_region
        %s124 = ssub.s32 %s16, 1
        // Predicated region
        $region13: #{tpu_custom_call.1} parent=11 // pred_check
          %p125 = pneg %p63
        $region14: #{tpu_custom_call.1} parent=11 // pred_check_branch
          %127 = sbr.rel (%p125) target = $region16
        $region15: #{tpu_custom_call.1} parent=11 // pred_region
          %s129 = ssub.s32 256, 256
          %130 = vsyncadd [#allocation6], %s129
          %s131 = sshll.u32 [#allocation5], 4
          %s132 = int_to_ptr.vmem [resolvable:$true] %s131
          %137 = dma.hbm_to_vmem [thread:$0]  %s1, 256, %s132, [#allocation6], 128, 128, 8
        $region16: #{tpu_custom_call.1} parent=11 // pred_fallthru
          _
        // Predicated region
        $region17: #{tpu_custom_call.1} parent=11 // pred_check
          %p138 = pneg %p84
        $region18: #{tpu_custom_call.1} parent=11 // pred_check_branch
          %140 = sbr.rel (%p138) target = $region20
        $region19: #{tpu_custom_call.1} parent=11 // pred_region
          %s142 = ssub.s32 256, 256
          %143 = vsyncadd [#allocation6], %s142
          %s144 = sshll.u32 [#allocation7], 4
          %s145 = int_to_ptr.vmem [resolvable:$true] %s144
          %150 = dma.hbm_to_vmem [thread:$0]  %s2, 256, %s145, [#allocation6], 128, 128, 8
        $region20: #{tpu_custom_call.1} parent=11 // pred_fallthru
          _
      $region12: #{tpu_custom_call.1} parent=5 // pred_fallthru
        _
      %p151 = scmp.lt.s32.totalorder %s16, 4
      // Predicated region
      $region21: #{tpu_custom_call.1} parent=5 // pred_check
        %p152 = pneg %p151
      $region22: #{tpu_custom_call.1} parent=5 // pred_check_branch
        %154 = sbr.rel (%p152) target = $region24
      $region23: #{tpu_custom_call.1} parent=5 // pred_region
        // Predicated region
        $region25: #{tpu_custom_call.1} parent=23 // pred_check
          %p155 = pneg %p36
        $region26: #{tpu_custom_call.1} parent=23 // pred_check_branch
          %157 = sbr.rel (%p155) target = $region28
        $region27: #{tpu_custom_call.1} parent=23 // pred_region
          %s158 = sand.u32 %s26, 1
          %s159 = scalar_lea.sflag [#allocation3], %s158
          %s160 = sand.u32 %s26, 1
          %s161 = smul.addr %s160, 32
          %s162 = scalar_lea.vmem [#allocation2], %s161
          %s163 = smul.u32 2, %s16
          %s165 = ssub.s32 512, 512
          %166 = vsyncadd %s159, %s165
          %s167 = smul.addr %s163, 2
          %s168 = smul.addr %s167, 128
          %s169 = scalar_lea.hbm %s0, %s168
          %s170 = sshll.u32 %s162, 4
          %s171 = int_to_ptr.vmem [resolvable:$true] %s170
          %176 = dma.hbm_to_vmem [thread:$0]  %s169, 512, %s171, %s159, 128, 128, 8
        $region28: #{tpu_custom_call.1} parent=23 // pred_fallthru
          _
      $region24: #{tpu_custom_call.1} parent=5 // pred_fallthru
        _
      %p177 = scmp.le.s32.totalorder 1, %s16
      %p178 = scmp.lt.s32.totalorder %s16, 5
      %p179 = pnand %p177, %p178
      %p180 = pneg %p179
      // Predicated region
      $region29: #{tpu_custom_call.1} parent=5 // pred_check
        _
      $region30: #{tpu_custom_call.1} parent=5 // pred_check_branch
        %182 = sbr.rel (%p179) target = $region32
      $region31: #{tpu_custom_call.1} parent=5 // pred_region
        %s183 = ssub.s32 %s16, 1
        %s184 = sand.u32 %s29, 1
        %s185 = scalar_lea.sflag [#allocation3], %s184
        %s186 = sand.u32 %s29, 1
        %s187 = smul.addr %s186, 32
        %s188 = scalar_lea.vmem [#allocation2], %s187
        // Predicated region
        $region33: #{tpu_custom_call.1} parent=31 // pred_check
          %p189 = pneg %p42
        $region34: #{tpu_custom_call.1} parent=31 // pred_check_branch
          %191 = sbr.rel (%p189) target = $region36
        $region35: #{tpu_custom_call.1} parent=31 // pred_region
          %192 = dma.done %s185, 512
        $region36: #{tpu_custom_call.1} parent=31 // pred_fallthru
          _
        // Predicated region
        $region37: #{tpu_custom_call.1} parent=31 // pred_check
          %p193 = pneg %p63
        $region38: #{tpu_custom_call.1} parent=31 // pred_check_branch
          %195 = sbr.rel (%p193) target = $region40
        $region39: #{tpu_custom_call.1} parent=31 // pred_region
          %196 = dma.done [#allocation6], 256
        $region40: #{tpu_custom_call.1} parent=31 // pred_fallthru
          _
        // Predicated region
        $region41: #{tpu_custom_call.1} parent=31 // pred_check
          %p197 = pneg %p84
        $region42: #{tpu_custom_call.1} parent=31 // pred_check_branch
          %199 = sbr.rel (%p197) target = $region44
        $region43: #{tpu_custom_call.1} parent=31 // pred_region
          %200 = dma.done [#allocation6], 256
        $region44: #{tpu_custom_call.1} parent=31 // pred_fallthru
          _
        %s201 = sand.u32 %s29, 1
        %s202 = scalar_lea.sflag [#allocation3], %s201
        %s203 = sand.u32 %s29, 1
        %s204 = smul.addr %s203, 32
        %s205 = scalar_lea.vmem [#allocation2], %s204
        %p206 = pneg %p42
        %p207 = pneg %p39
        %p208 = pneg %p63
        %p209 = pneg %p60
        %p210 = pneg %p84
        %p211 = pneg %p81
        %p212 = pneg %p110
        %p213 = pneg %p107
        %s214 = sand.u32 %s97, 1
        %s215 = scalar_lea.sflag [#allocation4], %s214
        %s216 = sand.u32 %s97, 1
        %s217 = smul.addr %s216, 32
        %s218 = scalar_lea.vmem [#allocation8], %s217
        %s219 = smul.u32 2, %s21
        %s220 = smul.u32 2, %s21
        %v221 = vld [vmem:[%s188] sm:$0xff]
        %v222 = vld [vmem:[%s188 + $0x8] sm:$0xff]
        %v223 = vld [vmem:[%s188 + $0x10] sm:$0xff]
        %v224 = vld [vmem:[%s188 + $0x18] sm:$0xff]
        %v225 = vld [vmem:[#allocation5] sm:$0xff]
        %v226 = vld [vmem:[#allocation5 + $0x8] sm:$0xff]
        %v227 = vld [vmem:[#allocation7] sm:$0xff]
        %v228 = vld [vmem:[#allocation7 + $0x8] sm:$0xff]
        %vm229 = vcmask 130048
        %v231 = vsel %vm229, %v221, 0
        %v234 = vsel %vm229, %v222, 0
        %236 = vmatprep.subr.mxu0 0.0
        %237 = vmatpush1.msra.mxu0 0.0
        %238 = vmatprep.subr.mxu0 0.0
        %239 = vmatpush1.msra.mxu0 0.0
        %240 = vmatprep.subr.mxu0 0.0
        %241 = vmatpush1.msra.mxu0 0.0
        %242 = vmatprep.subr.mxu0 0.0
        %243 = vmatpush1.msra.mxu0 0.0
        %244 = vmatprep.subr.mxu0 0.0
        %245 = vmatpush1.msra.mxu0 0.0
        %246 = vmatprep.subr.mxu0 0.0
        %247 = vmatpush1.msra.mxu0 0.0
        %248 = vmatprep.subr.mxu0 0.0
        %249 = vmatpush1.msra.mxu0 0.0
        %250 = vmatprep.subr.mxu0 0.0
        %251 = vmatpush1.msra.mxu0 0.0
        %252 = vmatprep.subr.mxu0 0.0
        %253 = vmatpush1.msra.mxu0 0.0
        %254 = vmatprep.subr.mxu0 0.0
        %255 = vmatpush1.msra.mxu0 0.0
        %256 = vmatprep.subr.mxu0 0.0
        %257 = vmatpush1.msra.mxu0 0.0
        %258 = vmatprep.subr.mxu0 0.0
        %259 = vmatpush1.msra.mxu0 0.0
        %260 = vmatprep.subr.mxu0 0.0
        %261 = vmatpush1.msra.mxu0 0.0
        %262 = vmatprep.subr.mxu0 0.0
        %263 = vmatpush1.msra.mxu0 0.0
        %264 = vmatprep.subr.mxu0 0.0
        %265 = vmatpush1.msra.mxu0 %v226
        %266 = vmatprep.subr.mxu0 0.0
        %267 = vmatpush1.msra.mxu0 %v225
        %268 = vmatprep.subr.mxu0 0.0
        %269 = vmatpush2.msra.mxu0 0.0
        %270 = vmatprep.subr.mxu0 0.0
        %271 = vmatpush2.msra.mxu0 0.0
        %272 = vmatprep.subr.mxu0 0.0
        %273 = vmatpush2.msra.mxu0 0.0
        %274 = vmatprep.subr.mxu0 0.0
        %275 = vmatpush2.msra.mxu0 0.0
        %276 = vmatprep.subr.mxu0 0.0
        %277 = vmatpush2.msra.mxu0 0.0
        %278 = vmatprep.subr.mxu0 0.0
        %279 = vmatpush2.msra.mxu0 0.0
        %280 = vmatprep.subr.mxu0 0.0
        %281 = vmatpush2.msra.mxu0 0.0
        %282 = vmatprep.subr.mxu0 0.0
        %283 = vmatpush2.msra.mxu0 0.0
        %284 = vmatprep.subr.mxu0 0.0
        %285 = vmatpush2.msra.mxu0 0.0
        %286 = vmatprep.subr.mxu0 0.0
        %287 = vmatpush2.msra.mxu0 0.0
        %288 = vmatprep.subr.mxu0 0.0
        %289 = vmatpush2.msra.mxu0 0.0
        %290 = vmatprep.subr.mxu0 0.0
        %291 = vmatpush2.msra.mxu0 0.0
        %292 = vmatprep.subr.mxu0 0.0
        %293 = vmatpush2.msra.mxu0 0.0
        %294 = vmatprep.subr.mxu0 0.0
        %295 = vmatpush2.msra.mxu0 0.0
        %296 = vmatprep.subr.mxu0 0.0
        %297 = vmatpush2.msra.mxu0 0.0
        %298 = vmatprep.subr.mxu0 0.0
        %299 = vmatpush2.msra.mxu0 0.0
        %300 = vmatprep.mubr.f32.mxu0 0.0
        %301 = vmatmul.mubr.f32.gmra.mxu0 %v231
        %v302 = vpop.f32.mrf.mxu0
        %v303 = vadd.f32 0.0, %v302
        %v304 = vpop.f32.mrf.mxu0
        %305 = vmatprep.mubr.f32.mxu0 0.0
        %306 = vmatmul.mubr.f32.gmra.mxu0 %v234
        %v307 = vpop.f32.mrf.mxu0
        %v308 = vadd.f32 0.0, %v307
        %v309 = vpop.f32.mrf.mxu0
        %310 = vdwg.mxu0
        %v312 = vsel %vm229, %v223, 0
        %v315 = vsel %vm229, %v224, 0
        %317 = vmatprep.subr.mxu0 0.0
        %318 = vmatpush1.msra.mxu0 0.0
        %319 = vmatprep.subr.mxu0 0.0
        %320 = vmatpush1.msra.mxu0 0.0
        %321 = vmatprep.subr.mxu0 0.0
        %322 = vmatpush1.msra.mxu0 0.0
        %323 = vmatprep.subr.mxu0 0.0
        %324 = vmatpush1.msra.mxu0 0.0
        %325 = vmatprep.subr.mxu0 0.0
        %326 = vmatpush1.msra.mxu0 0.0
        %327 = vmatprep.subr.mxu0 0.0
        %328 = vmatpush1.msra.mxu0 0.0
        %329 = vmatprep.subr.mxu0 0.0
        %330 = vmatpush1.msra.mxu0 0.0
        %331 = vmatprep.subr.mxu0 0.0
        %332 = vmatpush1.msra.mxu0 0.0
        %333 = vmatprep.subr.mxu0 0.0
        %334 = vmatpush1.msra.mxu0 0.0
        %335 = vmatprep.subr.mxu0 0.0
        %336 = vmatpush1.msra.mxu0 0.0
        %337 = vmatprep.subr.mxu0 0.0
        %338 = vmatpush1.msra.mxu0 0.0
        %339 = vmatprep.subr.mxu0 0.0
        %340 = vmatpush1.msra.mxu0 0.0
        %341 = vmatprep.subr.mxu0 0.0
        %342 = vmatpush1.msra.mxu0 0.0
        %343 = vmatprep.subr.mxu0 0.0
        %344 = vmatpush1.msra.mxu0 0.0
        %345 = vmatprep.subr.mxu0 0.0
        %346 = vmatpush1.msra.mxu0 %v226
        %347 = vmatprep.subr.mxu0 0.0
        %348 = vmatpush1.msra.mxu0 %v225
        %349 = vmatprep.subr.mxu0 0.0
        %350 = vmatpush2.msra.mxu0 0.0
        %351 = vmatprep.subr.mxu0 0.0
        %352 = vmatpush2.msra.mxu0 0.0
        %353 = vmatprep.subr.mxu0 0.0
        %354 = vmatpush2.msra.mxu0 0.0
        %355 = vmatprep.subr.mxu0 0.0
        %356 = vmatpush2.msra.mxu0 0.0
        %357 = vmatprep.subr.mxu0 0.0
        %358 = vmatpush2.msra.mxu0 0.0
        %359 = vmatprep.subr.mxu0 0.0
        %360 = vmatpush2.msra.mxu0 0.0
        %361 = vmatprep.subr.mxu0 0.0
        %362 = vmatpush2.msra.mxu0 0.0
        %363 = vmatprep.subr.mxu0 0.0
        %364 = vmatpush2.msra.mxu0 0.0
        %365 = vmatprep.subr.mxu0 0.0
        %366 = vmatpush2.msra.mxu0 0.0
        %367 = vmatprep.subr.mxu0 0.0
        %368 = vmatpush2.msra.mxu0 0.0
        %369 = vmatprep.subr.mxu0 0.0
        %370 = vmatpush2.msra.mxu0 0.0
        %371 = vmatprep.subr.mxu0 0.0
        %372 = vmatpush2.msra.mxu0 0.0
        %373 = vmatprep.subr.mxu0 0.0
        %374 = vmatpush2.msra.mxu0 0.0
        %375 = vmatprep.subr.mxu0 0.0
        %376 = vmatpush2.msra.mxu0 0.0
        %377 = vmatprep.subr.mxu0 0.0
        %378 = vmatpush2.msra.mxu0 0.0
        %379 = vmatprep.subr.mxu0 0.0
        %380 = vmatpush2.msra.mxu0 0.0
        %381 = vmatprep.mubr.f32.mxu0 0.0
        %382 = vmatmul.mubr.f32.gmra.mxu0 %v312
        %v383 = vpop.f32.mrf.mxu0
        %v384 = vadd.f32 0.0, %v383
        %v385 = vpop.f32.mrf.mxu0
        %386 = vmatprep.mubr.f32.mxu0 0.0
        %387 = vmatmul.mubr.f32.gmra.mxu0 %v315
        %v388 = vpop.f32.mrf.mxu0
        %v389 = vadd.f32 0.0, %v388
        %v390 = vpop.f32.mrf.mxu0
        %391 = vdwg.mxu0
        %v393 = vsel %vm229, %v227, 0
        %v396 = vsel %vm229, %v228, 0
        %398 = vmatprep.subr.mxu0 0.0
        %399 = vmatpush1.msra.mxu0 0.0
        %400 = vmatprep.subr.mxu0 0.0
        %401 = vmatpush1.msra.mxu0 0.0
        %402 = vmatprep.subr.mxu0 0.0
        %403 = vmatpush1.msra.mxu0 0.0
        %404 = vmatprep.subr.mxu0 0.0
        %405 = vmatpush1.msra.mxu0 0.0
        %406 = vmatprep.subr.mxu0 0.0
        %407 = vmatpush1.msra.mxu0 0.0
        %408 = vmatprep.subr.mxu0 0.0
        %409 = vmatpush1.msra.mxu0 0.0
        %410 = vmatprep.subr.mxu0 0.0
        %411 = vmatpush1.msra.mxu0 0.0
        %412 = vmatprep.subr.mxu0 0.0
        %413 = vmatpush1.msra.mxu0 0.0
        %414 = vmatprep.subr.mxu0 0.0
        %415 = vmatpush1.msra.mxu0 0.0
        %416 = vmatprep.subr.mxu0 0.0
        %417 = vmatpush1.msra.mxu0 0.0
        %418 = vmatprep.subr.mxu0 0.0
        %419 = vmatpush1.msra.mxu0 0.0
        %420 = vmatprep.subr.mxu0 0.0
        %421 = vmatpush1.msra.mxu0 0.0
        %422 = vmatprep.subr.mxu0 0.0
        %423 = vmatpush1.msra.mxu0 0.0
        %424 = vmatprep.subr.mxu0 0.0
        %425 = vmatpush1.msra.mxu0 0.0
        %426 = vmatprep.subr.mxu0 0.0
        %427 = vmatpush1.msra.mxu0 %v308
        %428 = vmatprep.subr.mxu0 0.0
        %429 = vmatpush1.msra.mxu0 %v303
        %430 = vmatprep.subr.mxu0 0.0
        %431 = vmatpush2.msra.mxu0 0.0
        %432 = vmatprep.subr.mxu0 0.0
        %433 = vmatpush2.msra.mxu0 0.0
        %434 = vmatprep.subr.mxu0 0.0
        %435 = vmatpush2.msra.mxu0 0.0
        %436 = vmatprep.subr.mxu0 0.0
        %437 = vmatpush2.msra.mxu0 0.0
        %438 = vmatprep.subr.mxu0 0.0
        %439 = vmatpush2.msra.mxu0 0.0
        %440 = vmatprep.subr.mxu0 0.0
        %441 = vmatpush2.msra.mxu0 0.0
        %442 = vmatprep.subr.mxu0 0.0
        %443 = vmatpush2.msra.mxu0 0.0
        %444 = vmatprep.subr.mxu0 0.0
        %445 = vmatpush2.msra.mxu0 0.0
        %446 = vmatprep.subr.mxu0 0.0
        %447 = vmatpush2.msra.mxu0 0.0
        %448 = vmatprep.subr.mxu0 0.0
        %449 = vmatpush2.msra.mxu0 0.0
        %450 = vmatprep.subr.mxu0 0.0
        %451 = vmatpush2.msra.mxu0 0.0
        %452 = vmatprep.subr.mxu0 0.0
        %453 = vmatpush2.msra.mxu0 0.0
        %454 = vmatprep.subr.mxu0 0.0
        %455 = vmatpush2.msra.mxu0 0.0
        %456 = vmatprep.subr.mxu0 0.0
        %457 = vmatpush2.msra.mxu0 0.0
        %458 = vmatprep.subr.mxu0 0.0
        %459 = vmatpush2.msra.mxu0 0.0
        %460 = vmatprep.subr.mxu0 0.0
        %461 = vmatpush2.msra.mxu0 0.0
        %462 = vmatprep.mubr.f32.mxu0 0.0
        %463 = vmatmul.mubr.f32.gmra.mxu0 %v393
        %v464 = vpop.f32.mrf.mxu0
        %v465 = vadd.f32 0.0, %v464
        %v466 = vpop.f32.mrf.mxu0
        %467 = vmatprep.mubr.f32.mxu0 0.0
        %468 = vmatmul.mubr.f32.gmra.mxu0 %v396
        %v469 = vpop.f32.mrf.mxu0
        %v470 = vadd.f32 0.0, %v469
        %v471 = vpop.f32.mrf.mxu0
        %472 = vdwg.mxu0
        %473 = vmatprep.subr.mxu0 0.0
        %474 = vmatpush1.msra.mxu0 0.0
        %475 = vmatprep.subr.mxu0 0.0
        %476 = vmatpush1.msra.mxu0 0.0
        %477 = vmatprep.subr.mxu0 0.0
        %478 = vmatpush1.msra.mxu0 0.0
        %479 = vmatprep.subr.mxu0 0.0
        %480 = vmatpush1.msra.mxu0 0.0
        %481 = vmatprep.subr.mxu0 0.0
        %482 = vmatpush1.msra.mxu0 0.0
        %483 = vmatprep.subr.mxu0 0.0
        %484 = vmatpush1.msra.mxu0 0.0
        %485 = vmatprep.subr.mxu0 0.0
        %486 = vmatpush1.msra.mxu0 0.0
        %487 = vmatprep.subr.mxu0 0.0
        %488 = vmatpush1.msra.mxu0 0.0
        %489 = vmatprep.subr.mxu0 0.0
        %490 = vmatpush1.msra.mxu0 0.0
        %491 = vmatprep.subr.mxu0 0.0
        %492 = vmatpush1.msra.mxu0 0.0
        %493 = vmatprep.subr.mxu0 0.0
        %494 = vmatpush1.msra.mxu0 0.0
        %495 = vmatprep.subr.mxu0 0.0
        %496 = vmatpush1.msra.mxu0 0.0
        %497 = vmatprep.subr.mxu0 0.0
        %498 = vmatpush1.msra.mxu0 0.0
        %499 = vmatprep.subr.mxu0 0.0
        %500 = vmatpush1.msra.mxu0 0.0
        %501 = vmatprep.subr.mxu0 0.0
        %502 = vmatpush1.msra.mxu0 %v389
        %503 = vmatprep.subr.mxu0 0.0
        %504 = vmatpush1.msra.mxu0 %v384
        %505 = vmatprep.subr.mxu0 0.0
        %506 = vmatpush2.msra.mxu0 0.0
        %507 = vmatprep.subr.mxu0 0.0
        %508 = vmatpush2.msra.mxu0 0.0
        %509 = vmatprep.subr.mxu0 0.0
        %510 = vmatpush2.msra.mxu0 0.0
        %511 = vmatprep.subr.mxu0 0.0
        %512 = vmatpush2.msra.mxu0 0.0
        %513 = vmatprep.subr.mxu0 0.0
        %514 = vmatpush2.msra.mxu0 0.0
        %515 = vmatprep.subr.mxu0 0.0
        %516 = vmatpush2.msra.mxu0 0.0
        %517 = vmatprep.subr.mxu0 0.0
        %518 = vmatpush2.msra.mxu0 0.0
        %519 = vmatprep.subr.mxu0 0.0
        %520 = vmatpush2.msra.mxu0 0.0
        %521 = vmatprep.subr.mxu0 0.0
        %522 = vmatpush2.msra.mxu0 0.0
        %523 = vmatprep.subr.mxu0 0.0
        %524 = vmatpush2.msra.mxu0 0.0
        %525 = vmatprep.subr.mxu0 0.0
        %526 = vmatpush2.msra.mxu0 0.0
        %527 = vmatprep.subr.mxu0 0.0
        %528 = vmatpush2.msra.mxu0 0.0
        %529 = vmatprep.subr.mxu0 0.0
        %530 = vmatpush2.msra.mxu0 0.0
        %531 = vmatprep.subr.mxu0 0.0
        %532 = vmatpush2.msra.mxu0 0.0
        %533 = vmatprep.subr.mxu0 0.0
        %534 = vmatpush2.msra.mxu0 0.0
        %535 = vmatprep.subr.mxu0 0.0
        %536 = vmatpush2.msra.mxu0 0.0
        %537 = vmatprep.mubr.f32.mxu0 0.0
        %538 = vmatmul.mubr.f32.gmra.mxu0 %v393
        %v539 = vpop.f32.mrf.mxu0
        %v540 = vadd.f32 0.0, %v539
        %v541 = vpop.f32.mrf.mxu0
        %542 = vmatprep.mubr.f32.mxu0 0.0
        %543 = vmatmul.mubr.f32.gmra.mxu0 %v396
        %v544 = vpop.f32.mrf.mxu0
        %v545 = vadd.f32 0.0, %v544
        %v546 = vpop.f32.mrf.mxu0
        %547 = vdwg.mxu0
        %548 = vst.msk [vmem:[%s218] sm:$0xff] %vm229, %v465
        %549 = vst.msk [vmem:[%s218 + $0x8] sm:$0xff] %vm229, %v470
        %550 = vst.msk [vmem:[%s218 + $0x10] sm:$0xff] %vm229, %v540
        %551 = vst.msk [vmem:[%s218 + $0x18] sm:$0xff] %vm229, %v545
        %s552 = sand.u32 %s97, 1
        %s553 = scalar_lea.sflag [#allocation4], %s552
        %s554 = sand.u32 %s97, 1
        %s555 = smul.addr %s554, 32
        %s556 = scalar_lea.vmem [#allocation8], %s555
        // Predicated region
        $region45: #{tpu_custom_call.1} parent=31 // pred_check
          %p557 = pneg %p107
        $region46: #{tpu_custom_call.1} parent=31 // pred_check_branch
          %559 = sbr.rel (%p557) target = $region48
        $region47: #{tpu_custom_call.1} parent=31 // pred_region
          %s560 = smul.u32 2, %s21
          %s562 = ssub.s32 512, 512
          %563 = vsyncadd %s553, %s562
          %s564 = smul.addr %s560, 2
          %s565 = smul.addr %s564, 128
          %s566 = scalar_lea.hbm %s3, %s565
          %s567 = sshll.u32 %s556, 4
          %s568 = int_to_ptr.vmem [resolvable:$true] %s567
          %573 = dma.vmem_to_hbm [thread:$0]  %s568, 512, %s566, %s553, 128, 128, 8
        $region48: #{tpu_custom_call.1} parent=31 // pred_fallthru
          _
      $region32: #{tpu_custom_call.1} parent=5 // pred_fallthru
        _
      %p574 = scmp.le.s32.totalorder 2, %s16
      // Predicated region
      $region49: #{tpu_custom_call.1} parent=5 // pred_check
        %p575 = pneg %p574
      $region50: #{tpu_custom_call.1} parent=5 // pred_check_branch
        %577 = sbr.rel (%p575) target = $region52
      $region51: #{tpu_custom_call.1} parent=5 // pred_region
        %s578 = ssub.s32 %s16, 2
        // Predicated region
        $region53: #{tpu_custom_call.1} parent=51 // pred_check
          %p579 = pneg %p113
        $region54: #{tpu_custom_call.1} parent=51 // pred_check_branch
          %581 = sbr.rel (%p579) target = $region56
        $region55: #{tpu_custom_call.1} parent=51 // pred_region
          %s582 = sand.u32 %s98, 1
          %s583 = scalar_lea.sflag [#allocation4], %s582
          %s584 = sand.u32 %s98, 1
          %s585 = smul.addr %s584, 32
          %s586 = scalar_lea.vmem [#allocation8], %s585
          %587 = dma.done %s583, 512
        $region56: #{tpu_custom_call.1} parent=51 // pred_fallthru
          _
      $region52: #{tpu_custom_call.1} parent=5 // pred_fallthru
        _
    $region6: #{tpu_custom_call.1} parent=1 // loop_footer
      %s20 = sadd.s32 1, %s16
    $region7: #{tpu_custom_call.1} parent=1 // loop_footer_branch
      %15 = sbr.rel target = $region3
    $region8: #{tpu_custom_call.1} parent=1 // loop_exit
      _
    %588 = vsyncpa [#allocation3], 1
    %s589 = scalar_lea.sflag [#allocation3], 1
    %590 = vsyncpa %s589, 1
    %591 = vsyncpa [#allocation6], 1
    %592 = vsyncpa [#allocation4], 1
    %s593 = scalar_lea.sflag [#allocation4], 1
    %594 = vsyncpa %s593, 1

</llo_original>
